<compile_context>
chip_gen: v7x
topology: tpu7x:2x2x1
jax: 0.10.0
libtpu: 0.0.40
codegen_flags: <defaults>
</compile_context>

<pallas_src>
import functools

import jax
import jax.numpy as jnp
from jax.experimental import pallas as pl
from jax.experimental.pallas import tpu as pltpu


def _round_up(n, m):
    return ((n + m - 1) // m) * m


def dqn_kernel(x_ref, w1_ref, b1_ref, w2_ref, b2_ref, w3_ref, b3_ref, out_ref,
               *, fc1_chunk):
    x = x_ref[...]                      # (TM, n_in)  f32
    w1 = w1_ref[...]                    # (n_in, H)   f32
    b1 = b1_ref[...]                    # (1, H)      f32
    n_in = w1.shape[0]
    tm = x.shape[0]

    # fc1 + relu: K is tiny -> VPU broadcast-FMAs, keep it off the MXU.
    # Bias is the accumulator init; ReLU is fused with the bf16 cast feeding
    # the fc2 MXU dot. Rows are processed in <=128-row chunks so the live f32
    # accumulator never exceeds 32 vregs (matters when tm=256 is used).
    h1_chunks = []
    for r0 in range(0, tm, fc1_chunk):          # static unroll
        xc = x[r0:r0 + fc1_chunk, :]
        acc = xc[:, 0:1] * w1[0:1, :] + b1      # bias folded into init
        for i in range(1, n_in):                # static unroll (n_in = 2)
            acc = acc + xc[:, i:i + 1] * w1[i:i + 1, :]
        h1_chunks.append(jnp.maximum(acc, 0.0).astype(jnp.bfloat16))
    h1 = h1_chunks[0] if len(h1_chunks) == 1 else jnp.concatenate(h1_chunks, 0)

    # fc2 + relu: bf16 operands into the MXU, f32 accumulation/elementwise.
    h2 = jnp.dot(h1, w2_ref[...], preferred_element_type=jnp.float32)
    h2 = jnp.maximum(h2 + b2_ref[...], 0.0).astype(jnp.bfloat16)

    # fc3 (no activation), lane-dense 128-wide padded output columns.
    y = jnp.dot(h2, w3_ref[...], preferred_element_type=jnp.float32)
    out_ref[...] = (y + b3_ref[...]).astype(out_ref.dtype)


def dqn_forward(x, params, n_actions, tm=None, out_dtype=jnp.float32):
    """x: (B, n_inputs) f32. params as produced by prep_params()."""
    w1, b1, w2, b2, w3p, b3p = params
    B, n_in = x.shape
    H = w1.shape[1]
    NP = w3p.shape[1]                   # padded (lane-dense) output width

    if tm is None:
        # Adaptive row tile: 16 covers the bf16 sublane pack of the MXU
        # operands; cap at 128 (right for v5e's 128x128 MXU and fine
        # everywhere). For large training batches on v6e/v7x pass tm=256:
        # per-tile VMEM stays well under 2 MB, far below the 64 MiB v7x limit.
        tm = min(128, _round_up(max(B, 1), 16))

    Bp = _round_up(B, tm)
    if Bp != B:
        x = jnp.pad(x, ((0, Bp - B), (0, 0)))
    # NOTE: the (tm, 2) x block is a strided DMA (8 bytes/row); total bytes
    # are trivial, so n_in is deliberately not padded to 8 lanes here.

    fc1_chunk = min(tm, 128)

    out = pl.pallas_call(
        functools.partial(dqn_kernel, fc1_chunk=fc1_chunk),
        out_shape=jax.ShapeDtypeStruct((Bp, NP), out_dtype),
        grid=(Bp // tm,),
        in_specs=[
            pl.BlockSpec((tm, n_in), lambda i: (i, 0)),   # x tile
            pl.BlockSpec((n_in, H), lambda i: (0, 0)),    # w1 (resident)
            pl.BlockSpec((1, H), lambda i: (0, 0)),       # b1 (resident)
            pl.BlockSpec((H, H), lambda i: (0, 0)),       # w2 bf16 (resident)
            pl.BlockSpec((1, H), lambda i: (0, 0)),       # b2 (resident)
            pl.BlockSpec((H, NP), lambda i: (0, 0)),      # w3 bf16 padded
            pl.BlockSpec((1, NP), lambda i: (0, 0)),      # b3 padded
        ],
        out_specs=pl.BlockSpec((tm, NP), lambda i: (i, 0)),
        compiler_params=pltpu.CompilerParams(
            dimension_semantics=("parallel",)),
    )(x, w1, b1, w2, b2, w3p, b3p)

    if Bp != B:
        out = out[:B]
    # Padded output lanes carry y = 0 + b3p = 0; the column slice keeps them
    # out of the caller's view (mask lanes >= n_actions to -inf instead if an
    # argmax is ever fused into the kernel / consumes the padded slab).
    return out[:, :n_actions]


def init_params(key, n_inputs, n_actions, hidden=256):
    # Mirrors nn.Linear's U(-1/sqrt(fan_in), 1/sqrt(fan_in)); stored as (in, out).
    keys = jax.random.split(key, 6)

    def linear(kw, kb, fan_in, fan_out):
        bound = 1.0 / jnp.sqrt(fan_in)
        w = jax.random.uniform(kw, (fan_in, fan_out), jnp.float32, -bound, bound)
        b = jax.random.uniform(kb, (1, fan_out), jnp.float32, -bound, bound)
        return w, b

    w1, b1 = linear(keys[0], keys[1], n_inputs, hidden)
    w2, b2 = linear(keys[2], keys[3], hidden, hidden)
    w3, b3 = linear(keys[4], keys[5], hidden, n_actions)
    return (w1, b1, w2, b2, w3, b3)


def prep_params(raw_params):
    """Cast fc2/fc3 weights to bf16 and zero-pad fc3 to a lane-dense width."""
    w1, b1, w2, b2, w3, b3 = raw_params
    H, n_actions = w3.shape
    NP = ((n_actions + 127) // 128) * 128
    w3p = jnp.zeros((H, NP), jnp.bfloat16).at[:, :n_actions].set(
        w3.astype(jnp.bfloat16))
    b3p = jnp.zeros((1, NP), jnp.float32).at[:, :n_actions].set(b3)
    return (w1, b1, w2.astype(jnp.bfloat16), b2, w3p, b3p)


if __name__ == "__main__":
    # MappingRobotEnv: state is a 2-vector, action_space = 5.
    n_inputs, n_actions, batch = 2, 5, 8
    key = jax.random.PRNGKey(0)
    kx, kp = jax.random.split(key)
    x = jax.random.normal(kx, (batch, n_inputs), dtype=jnp.float32)

    raw = init_params(kp, n_inputs, n_actions)
    params = prep_params(raw)

    out = dqn_forward(x, params, n_actions)
    jax.block_until_ready(out)

    # Reference in plain JAX, mirroring the kernel's numerics:
    # fc1 in f32, fc2/fc3 with bf16-rounded operands and f32 accumulation.
    w1, b1, w2, b2, w3, b3 = raw
    hi = jax.lax.Precision.HIGHEST
    w2r = w2.astype(jnp.bfloat16).astype(jnp.float32)
    w3r = w3.astype(jnp.bfloat16).astype(jnp.float32)
    h1 = jnp.maximum(jnp.dot(x, w1, precision=hi) + b1, 0.0)
    h2 = jnp.maximum(
        jnp.dot(h1.astype(jnp.bfloat16).astype(jnp.float32), w2r,
                precision=hi) + b2, 0.0)
    ref = jnp.dot(h2.astype(jnp.bfloat16).astype(jnp.float32), w3r,
                  precision=hi) + b3

    assert out.shape == (batch, n_actions)
    assert jnp.allclose(out, ref, atol=2e-4, rtol=2e-4), \
        float(jnp.max(jnp.abs(out - ref)))

    print("KERNEL_OK")
</pallas_src>

<mosaic_0001>
module attributes {stable_mosaic.version = 11 : i64} {
  func.func @dqn_kernel(%arg0: i32, %arg1: memref<16x2xf32, #tpu.memory_space<vmem>>, %arg2: memref<2x256xf32, #tpu.memory_space<vmem>>, %arg3: memref<1x256xf32, #tpu.memory_space<vmem>>, %arg4: memref<256x256xbf16, #tpu.memory_space<vmem>>, %arg5: memref<1x256xf32, #tpu.memory_space<vmem>>, %arg6: memref<256x128xbf16, #tpu.memory_space<vmem>>, %arg7: memref<1x128xf32, #tpu.memory_space<vmem>>, %arg8: memref<16x128xf32, #tpu.memory_space<vmem>>) attributes {dimension_semantics = [#tpu.dimension_semantics<parallel>], iteration_bounds = array<i64: 1>, scalar_prefetch = 0 : i64, scratch_operands = 0 : i64, tpu.core_type = #tpu.core_type<tc>, window_params = [{transform_indices = @transform_0, window_bounds = array<i64: 16, 2>}, {pipeline_mode = #tpu.pipeline_mode<synchronous>, transform_indices = @transform_1, window_bounds = array<i64: 2, 256>}, {pipeline_mode = #tpu.pipeline_mode<synchronous>, transform_indices = @transform_2, window_bounds = array<i64: 1, 256>}, {pipeline_mode = #tpu.pipeline_mode<synchronous>, transform_indices = @transform_3, window_bounds = array<i64: 256, 256>}, {pipeline_mode = #tpu.pipeline_mode<synchronous>, transform_indices = @transform_4, window_bounds = array<i64: 1, 256>}, {pipeline_mode = #tpu.pipeline_mode<synchronous>, transform_indices = @transform_5, window_bounds = array<i64: 256, 128>}, {pipeline_mode = #tpu.pipeline_mode<synchronous>, transform_indices = @transform_6, window_bounds = array<i64: 1, 128>}, {transform_indices = @transform_7, window_bounds = array<i64: 16, 128>}]} {
    %c0 = arith.constant 0 : index
    %c0_0 = arith.constant 0 : index
    %0 = vector.load %arg1[%c0, %c0_0] : memref<16x2xf32, #tpu.memory_space<vmem>>, vector<16x2xf32>
    %c0_1 = arith.constant 0 : index
    %c0_2 = arith.constant 0 : index
    %1 = vector.load %arg2[%c0_1, %c0_2] : memref<2x256xf32, #tpu.memory_space<vmem>>, vector<2x256xf32>
    %c0_3 = arith.constant 0 : index
    %c0_4 = arith.constant 0 : index
    %2 = vector.load %arg3[%c0_3, %c0_4] : memref<1x256xf32, #tpu.memory_space<vmem>>, vector<1x256xf32>
    %3 = vector.extract_strided_slice %0 {offsets = [0, 0], sizes = [16, 1], strides = [1, 1]} : vector<16x2xf32> to vector<16x1xf32>
    %4 = vector.extract_strided_slice %1 {offsets = [0, 0], sizes = [1, 256], strides = [1, 1]} : vector<2x256xf32> to vector<1x256xf32>
    %5 = vector.broadcast %3 : vector<16x1xf32> to vector<16x256xf32>
    %6 = vector.broadcast %4 : vector<1x256xf32> to vector<16x256xf32>
    %7 = arith.mulf %5, %6 : vector<16x256xf32>
    %8 = vector.broadcast %2 : vector<1x256xf32> to vector<16x256xf32>
    %9 = arith.addf %7, %8 : vector<16x256xf32>
    %10 = vector.extract_strided_slice %0 {offsets = [0, 1], sizes = [16, 1], strides = [1, 1]} : vector<16x2xf32> to vector<16x1xf32>
    %11 = vector.extract_strided_slice %1 {offsets = [1, 0], sizes = [1, 256], strides = [1, 1]} : vector<2x256xf32> to vector<1x256xf32>
    %12 = vector.broadcast %10 : vector<16x1xf32> to vector<16x256xf32>
    %13 = vector.broadcast %11 : vector<1x256xf32> to vector<16x256xf32>
    %14 = arith.mulf %12, %13 : vector<16x256xf32>
    %15 = arith.addf %9, %14 : vector<16x256xf32>
    %cst = arith.constant 0.000000e+00 : f32
    %16 = vector.broadcast %cst : f32 to vector<16x256xf32>
    %17 = arith.maximumf %15, %16 : vector<16x256xf32>
    %18 = arith.truncf %17 : vector<16x256xf32> to vector<16x256xbf16>
    %c0_5 = arith.constant 0 : index
    %c0_6 = arith.constant 0 : index
    %19 = vector.load %arg4[%c0_5, %c0_6] : memref<256x256xbf16, #tpu.memory_space<vmem>>, vector<256x256xbf16>
    %cst_7 = arith.constant dense<0.000000e+00> : vector<16x256xf32>
    %20 = tpu.matmul %18, %19, %cst_7 {dimension_numbers = #tpu.dot_dimension_numbers<[1], [0], [0], [1], [0, 0, 1, 1], [], []>} : vector<16x256xbf16>, vector<256x256xbf16>, vector<16x256xf32> -> vector<16x256xf32>
    %c0_8 = arith.constant 0 : index
    %c0_9 = arith.constant 0 : index
    %21 = vector.load %arg5[%c0_8, %c0_9] : memref<1x256xf32, #tpu.memory_space<vmem>>, vector<1x256xf32>
    %22 = vector.broadcast %21 : vector<1x256xf32> to vector<16x256xf32>
    %23 = arith.addf %20, %22 : vector<16x256xf32>
    %cst_10 = arith.constant 0.000000e+00 : f32
    %24 = vector.broadcast %cst_10 : f32 to vector<16x256xf32>
    %25 = arith.maximumf %23, %24 : vector<16x256xf32>
    %26 = arith.truncf %25 : vector<16x256xf32> to vector<16x256xbf16>
    %c0_11 = arith.constant 0 : index
    %c0_12 = arith.constant 0 : index
    %27 = vector.load %arg6[%c0_11, %c0_12] : memref<256x128xbf16, #tpu.memory_space<vmem>>, vector<256x128xbf16>
    %cst_13 = arith.constant dense<0.000000e+00> : vector<16x128xf32>
    %28 = tpu.matmul %26, %27, %cst_13 {dimension_numbers = #tpu.dot_dimension_numbers<[1], [0], [0], [1], [0, 0, 1, 1], [], []>} : vector<16x256xbf16>, vector<256x128xbf16>, vector<16x128xf32> -> vector<16x128xf32>
    %c0_14 = arith.constant 0 : index
    %c0_15 = arith.constant 0 : index
    %29 = vector.load %arg7[%c0_14, %c0_15] : memref<1x128xf32, #tpu.memory_space<vmem>>, vector<1x128xf32>
    %30 = vector.broadcast %29 : vector<1x128xf32> to vector<16x128xf32>
    %31 = arith.addf %28, %30 : vector<16x128xf32>
    %c0_16 = arith.constant 0 : index
    %c0_17 = arith.constant 0 : index
    %32 = vector.load %arg8[%c0_16, %c0_17] : memref<16x128xf32, #tpu.memory_space<vmem>>, vector<16x128xf32>
    tpu.vector_store %arg8[%c0_16, %c0_17], %31 {strides = array<i32>} : memref<16x128xf32, #tpu.memory_space<vmem>>, vector<16x128xf32>,
    return
  }
  func.func @transform_0(%arg0: i32) -> (i32, i32) {
    %c0_i32 = arith.constant 0 : i32
    %c0_i32_0 = arith.constant 0 : i32
    return %arg0, %c0_i32 : i32, i32
  }
  func.func @transform_1(%arg0: i32) -> (i32, i32) {
    %c0_i32 = arith.constant 0 : i32
    %c0_i32_0 = arith.constant 0 : i32
    %c0_i32_1 = arith.constant 0 : i32
    return %c0_i32, %c0_i32_0 : i32, i32
  }
  func.func @transform_2(%arg0: i32) -> (i32, i32) {
    %c0_i32 = arith.constant 0 : i32
    %c0_i32_0 = arith.constant 0 : i32
    %c0_i32_1 = arith.constant 0 : i32
    return %c0_i32, %c0_i32_0 : i32, i32
  }
  func.func @transform_3(%arg0: i32) -> (i32, i32) {
    %c0_i32 = arith.constant 0 : i32
    %c0_i32_0 = arith.constant 0 : i32
    %c0_i32_1 = arith.constant 0 : i32
    return %c0_i32, %c0_i32_0 : i32, i32
  }
  func.func @transform_4(%arg0: i32) -> (i32, i32) {
    %c0_i32 = arith.constant 0 : i32
    %c0_i32_0 = arith.constant 0 : i32
    %c0_i32_1 = arith.constant 0 : i32
    return %c0_i32, %c0_i32_0 : i32, i32
  }
  func.func @transform_5(%arg0: i32) -> (i32, i32) {
    %c0_i32 = arith.constant 0 : i32
    %c0_i32_0 = arith.constant 0 : i32
    %c0_i32_1 = arith.constant 0 : i32
    return %c0_i32, %c0_i32_0 : i32, i32
  }
  func.func @transform_6(%arg0: i32) -> (i32, i32) {
    %c0_i32 = arith.constant 0 : i32
    %c0_i32_0 = arith.constant 0 : i32
    %c0_i32_1 = arith.constant 0 : i32
    return %c0_i32, %c0_i32_0 : i32, i32
  }
  func.func @transform_7(%arg0: i32) -> (i32, i32) {
    %c0_i32 = arith.constant 0 : i32
    %c0_i32_0 = arith.constant 0 : i32
    return %arg0, %c0_i32 : i32, i32
  }
}

</mosaic_0001>

<llo_original>
// kernel: tpu_custom_call.1
$region0: #{tpu_custom_call.1}
  #allocation0 [shape = 'u32[]', space=smem, size = 0x4, offset = 0x4, fixed_abs, tag = 'smem constant byte address 0x4 - core index']
  #allocation1 [shape = 'u32[144,128]{1,0:T(1,128)}', space=vmem, size = 0x12000, scoped, tag = 'internal scratch']
  %s0 = inlined_call_operand.vmem [shape: f32[16,2], index: 0, kind: input, shape index: {}]
  %s1 = inlined_call_operand.vmem [shape: f32[2,256], index: 1, kind: input, shape index: {}]
  %s2 = inlined_call_operand.vmem [shape: f32[1,256], index: 2, kind: input, shape index: {}]
  %s3 = inlined_call_operand.hbm [shape: bf16[256,256], index: 3, kind: input, shape index: {}]
  %s4 = inlined_call_operand.vmem [shape: f32[1,256], index: 4, kind: input, shape index: {}]
  %s5 = inlined_call_operand.hbm [shape: bf16[256,128], index: 5, kind: input, shape index: {}]
  %s6 = inlined_call_operand.vmem [shape: f32[1,128], index: 6, kind: input, shape index: {}]
  %s7 = inlined_call_operand.hbm [shape: f32[16,128], index: 7, kind: output, shape index: {}]
  %s8 = sld [smem:[#allocation0]]
  $region46: #{tpu_custom_call.1} parent=0
    _
  %s10 = ssub.s32 1, %s8
  %s11 = scalar_select 0, %s10, %s8
  $region1: #{tpu_custom_call.1} parent=0
    #allocation2 [shape = 'u8[131072]{0}', space=vmem, size = 0x20000, scoped, tag = 'input window, operand 3, single buffered']
    #allocation3 [shape = 's32[1]{0}', space=sflag, size = 0x4, scoped, tag = 'scoped memory for tpu_custom_call.1']
    #allocation4 [shape = 's32[1]{0}', space=sflag, size = 0x4, scoped, tag = 'scoped memory for tpu_custom_call.1']
    #allocation5 [shape = 'u8[65536]{0}', space=vmem, size = 0x10000, scoped, tag = 'input window, operand 5, single buffered']
    #allocation6 [shape = 's32[1]{0}', space=sflag, size = 0x4, scoped, tag = 'scoped memory for tpu_custom_call.1']
    #allocation7 [shape = 'u8[8192]{0}', space=vmem, size = 0x2000, scoped, tag = 'output window, operand 0, single buffered']
    %12 = vsyncpa [#allocation3], 0
    %13 = vsyncpa [#allocation6], 0
    %14 = vsyncpa [#allocation4], 0
    // Predicated region
    $region2: #{tpu_custom_call.1} parent=1 // pred_check
      _
    $region3: #{tpu_custom_call.1} parent=1 // pred_check_branch
      %16 = sbr.rel (0) target = $region5
    $region4: #{tpu_custom_call.1} parent=1 // pred_region
      _
    $region5: #{tpu_custom_call.1} parent=1 // pred_fallthru
      _
    // Predicated region
    $region6: #{tpu_custom_call.1} parent=1 // pred_check
      _
    $region7: #{tpu_custom_call.1} parent=1 // pred_check_branch
      %18 = sbr.rel (0) target = $region9
    $region8: #{tpu_custom_call.1} parent=1 // pred_region
      _
    $region9: #{tpu_custom_call.1} parent=1 // pred_fallthru
      _
    // Predicated region
    $region10: #{tpu_custom_call.1} parent=1 // pred_check
      _
    $region11: #{tpu_custom_call.1} parent=1 // pred_check_branch
      %20 = sbr.rel (0) target = $region13
    $region12: #{tpu_custom_call.1} parent=1 // pred_region
      _
    $region13: #{tpu_custom_call.1} parent=1 // pred_fallthru
      _
    // Predicated region
    $region14: #{tpu_custom_call.1} parent=1 // pred_check
      _
    $region15: #{tpu_custom_call.1} parent=1 // pred_check_branch
      %22 = sbr.rel (0) target = $region17
    $region16: #{tpu_custom_call.1} parent=1 // pred_region
      %s24 = ssub.s32 4096, 4096
      %25 = vsyncadd [#allocation3], %s24
      %s26 = sshll.u32 [#allocation2], 4
      %s27 = int_to_ptr.vmem [resolvable:$true] %s26
      %32 = dma.hbm_to_vmem [thread:$0]  %s3, 4096, %s27, [#allocation3], 128, 128, 8
    $region17: #{tpu_custom_call.1} parent=1 // pred_fallthru
      _
    // Predicated region
    $region18: #{tpu_custom_call.1} parent=1 // pred_check
      _
    $region19: #{tpu_custom_call.1} parent=1 // pred_check_branch
      %34 = sbr.rel (0) target = $region21
    $region20: #{tpu_custom_call.1} parent=1 // pred_region
      _
    $region21: #{tpu_custom_call.1} parent=1 // pred_fallthru
      _
    // Predicated region
    $region22: #{tpu_custom_call.1} parent=1 // pred_check
      _
    $region23: #{tpu_custom_call.1} parent=1 // pred_check_branch
      %36 = sbr.rel (0) target = $region25
    $region24: #{tpu_custom_call.1} parent=1 // pred_region
      %s38 = ssub.s32 2048, 2048
      %39 = vsyncadd [#allocation6], %s38
      %s40 = sshll.u32 [#allocation5], 4
      %s41 = int_to_ptr.vmem [resolvable:$true] %s40
      %46 = dma.hbm_to_vmem [thread:$0]  %s5, 2048, %s41, [#allocation6], 64, 64, 4
    $region25: #{tpu_custom_call.1} parent=1 // pred_fallthru
      _
    // Predicated region
    $region26: #{tpu_custom_call.1} parent=1 // pred_check
      _
    $region27: #{tpu_custom_call.1} parent=1 // pred_check_branch
      %48 = sbr.rel (0) target = $region29
    $region28: #{tpu_custom_call.1} parent=1 // pred_region
      _
    $region29: #{tpu_custom_call.1} parent=1 // pred_fallthru
      _
    // Predicated region
    $region30: #{tpu_custom_call.1} parent=1 // pred_check
      _
    $region31: #{tpu_custom_call.1} parent=1 // pred_check_branch
      %50 = sbr.rel (0) target = $region33
    $region32: #{tpu_custom_call.1} parent=1 // pred_region
      %51 = dma.done [#allocation3], 4096
    $region33: #{tpu_custom_call.1} parent=1 // pred_fallthru
      _
    // Predicated region
    $region34: #{tpu_custom_call.1} parent=1 // pred_check
      _
    $region35: #{tpu_custom_call.1} parent=1 // pred_check_branch
      %53 = sbr.rel (0) target = $region37
    $region36: #{tpu_custom_call.1} parent=1 // pred_region
      %54 = dma.done [#allocation6], 2048
    $region37: #{tpu_custom_call.1} parent=1 // pred_fallthru
      _
    %v56 = vld [vmem:[%s0] sm:$0xff]
    %v57 = vld [vmem:[%s0 + $0x8] sm:$0xff]
    %v58 = vld [vmem:[%s1] sm:$0xf]
    %v59 = vld [vmem:[%s2] sm:$0x3]
    %61 = vset.pattern.permute.xlu0 0
    %62 = vperm.xlu0 %61, %v56
    %v63 = vpop.permute.xlu0 %62
    %66 = vset.pattern.permute.xlu0 0
    %67 = vperm.xlu0 %66, %v57
    %v68 = vpop.permute.xlu0 %67
    %v71 = vlaneseq
    %v72 = vshrl.u32 %v71, 7
    %v73 = vsub.s32 0, %v72
    %v74 = vrot.slane %v58, %v73
    %v75 = vlaneseq
    %v76 = vshrl.u32 %v75, 7
    %v77 = vsub.s32 2, %v76
    %v78 = vrot.slane %v58, %v77
    %v81 = vlaneseq
    %v82 = vshrl.u32 %v81, 7
    %v83 = vsub.s32 0, %v82
    %v84 = vrot.slane %v74, %v83
    %v85 = vlaneseq
    %v86 = vshrl.u32 %v85, 7
    %v87 = vsub.s32 0, %v86
    %v88 = vrot.slane %v78, %v87
    %v89 = vmul.f32 %v63, %v84
    %v90 = vmul.f32 %v63, %v88
    %v91 = vmul.f32 %v68, %v84
    %v92 = vmul.f32 %v68, %v88
    %v94 = vlaneseq
    %v95 = vshrl.u32 %v94, 7
    %v96 = vsub.s32 0, %v95
    %v97 = vrot.slane %v59, %v96
    %v98 = vlaneseq
    %v99 = vshrl.u32 %v98, 7
    %v100 = vsub.s32 1, %v99
    %v101 = vrot.slane %v59, %v100
    %v104 = vadd.f32 %v89, %v97
    %v105 = vadd.f32 %v90, %v101
    %v106 = vadd.f32 %v91, %v97
    %v107 = vadd.f32 %v92, %v101
    %108 = vset.pattern.permute.xlu0 1
    %109 = vperm.xlu0 %108, %v56
    %v110 = vpop.permute.xlu0 %109
    %112 = vset.pattern.permute.xlu0 1
    %113 = vperm.xlu0 %112, %v57
    %v114 = vpop.permute.xlu0 %113
    %v116 = vlaneseq
    %v117 = vshrl.u32 %v116, 7
    %v118 = vsub.s32 1, %v117
    %v119 = vrot.slane %v58, %v118
    %v120 = vlaneseq
    %v121 = vshrl.u32 %v120, 7
    %v122 = vsub.s32 3, %v121
    %v123 = vrot.slane %v58, %v122
    %v126 = vlaneseq
    %v127 = vshrl.u32 %v126, 7
    %v128 = vsub.s32 1, %v127
    %v129 = vrot.slane %v119, %v128
    %v130 = vlaneseq
    %v131 = vshrl.u32 %v130, 7
    %v132 = vsub.s32 1, %v131
    %v133 = vrot.slane %v123, %v132
    %v134 = vmul.f32 %v110, %v129
    %v135 = vmul.f32 %v110, %v133
    %v136 = vmul.f32 %v114, %v129
    %v137 = vmul.f32 %v114, %v133
    %v138 = vadd.f32 %v104, %v134
    %v139 = vadd.f32 %v105, %v135
    %v140 = vadd.f32 %v106, %v136
    %v141 = vadd.f32 %v107, %v137
    %v142 = vmax.f32 %v138, 0.0
    %v143 = vmax.f32 %v139, 0.0
    %v144 = vmax.f32 %v140, 0.0
    %v145 = vmax.f32 %v141, 0.0
    %v146 = vpack.c.bf16 %v144, %v142
    %v147 = vpack.c.bf16 %v145, %v143
    %v148 = vld [vmem:[#allocation2] sm:$0xff]
    %v149 = vld [vmem:[#allocation2 + $0x8] sm:$0xff]
    %v150 = vld [vmem:[#allocation2 + $0x10] sm:$0xff]
    %v151 = vld [vmem:[#allocation2 + $0x18] sm:$0xff]
    %v152 = vld [vmem:[#allocation2 + $0x20] sm:$0xff]
    %v153 = vld [vmem:[#allocation2 + $0x28] sm:$0xff]
    %v154 = vld [vmem:[#allocation2 + $0x30] sm:$0xff]
    %v155 = vld [vmem:[#allocation2 + $0x38] sm:$0xff]
    %v156 = vld [vmem:[#allocation2 + $0x40] sm:$0xff]
    %v157 = vld [vmem:[#allocation2 + $0x48] sm:$0xff]
    %v158 = vld [vmem:[#allocation2 + $0x50] sm:$0xff]
    %v159 = vld [vmem:[#allocation2 + $0x58] sm:$0xff]
    %v160 = vld [vmem:[#allocation2 + $0x60] sm:$0xff]
    %v161 = vld [vmem:[#allocation2 + $0x68] sm:$0xff]
    %v162 = vld [vmem:[#allocation2 + $0x70] sm:$0xff]
    %v163 = vld [vmem:[#allocation2 + $0x78] sm:$0xff]
    %v164 = vld [vmem:[#allocation2 + $0x80] sm:$0xff]
    %v165 = vld [vmem:[#allocation2 + $0x88] sm:$0xff]
    %v166 = vld [vmem:[#allocation2 + $0x90] sm:$0xff]
    %v167 = vld [vmem:[#allocation2 + $0x98] sm:$0xff]
    %v168 = vld [vmem:[#allocation2 + $0xa0] sm:$0xff]
    %v169 = vld [vmem:[#allocation2 + $0xa8] sm:$0xff]
    %v170 = vld [vmem:[#allocation2 + $0xb0] sm:$0xff]
    %v171 = vld [vmem:[#allocation2 + $0xb8] sm:$0xff]
    %v172 = vld [vmem:[#allocation2 + $0xc0] sm:$0xff]
    %v173 = vld [vmem:[#allocation2 + $0xc8] sm:$0xff]
    %v174 = vld [vmem:[#allocation2 + $0xd0] sm:$0xff]
    %v175 = vld [vmem:[#allocation2 + $0xd8] sm:$0xff]
    %v176 = vld [vmem:[#allocation2 + $0xe0] sm:$0xff]
    %v177 = vld [vmem:[#allocation2 + $0xe8] sm:$0xff]
    %v178 = vld [vmem:[#allocation2 + $0xf0] sm:$0xff]
    %v179 = vld [vmem:[#allocation2 + $0xf8] sm:$0xff]
    %v180 = vld [vmem:[%s4] sm:$0x3]
    %v182 = vlaneseq
    %v183 = vshrl.u32 %v182, 7
    %v184 = vsub.s32 0, %v183
    %v185 = vrot.slane %v180, %v184
    %v186 = vlaneseq
    %v187 = vshrl.u32 %v186, 7
    %v188 = vsub.s32 1, %v187
    %v189 = vrot.slane %v180, %v188
    %v224 = vunpack.c.l.b16 %v148
    %v225 = vunpack.c.h.b16 %v148
    %v226 = vunpack.c.l.b16 %v149
    %v227 = vunpack.c.h.b16 %v149
    %v228 = vunpack.c.l.b16 %v150
    %v229 = vunpack.c.h.b16 %v150
    %v230 = vunpack.c.l.b16 %v151
    %v231 = vunpack.c.h.b16 %v151
    %v232 = vunpack.c.l.b16 %v152
    %v233 = vunpack.c.h.b16 %v152
    %v234 = vunpack.c.l.b16 %v153
    %v235 = vunpack.c.h.b16 %v153
    %v236 = vunpack.c.l.b16 %v154
    %v237 = vunpack.c.h.b16 %v154
    %v238 = vunpack.c.l.b16 %v155
    %v239 = vunpack.c.h.b16 %v155
    %v240 = vunpack.c.l.b16 %v156
    %v241 = vunpack.c.h.b16 %v156
    %v242 = vunpack.c.l.b16 %v157
    %v243 = vunpack.c.h.b16 %v157
    %v244 = vunpack.c.l.b16 %v158
    %v245 = vunpack.c.h.b16 %v158
    %v246 = vunpack.c.l.b16 %v159
    %v247 = vunpack.c.h.b16 %v159
    %v248 = vunpack.c.l.b16 %v160
    %v249 = vunpack.c.h.b16 %v160
    %v250 = vunpack.c.l.b16 %v161
    %v251 = vunpack.c.h.b16 %v161
    %v252 = vunpack.c.l.b16 %v162
    %v253 = vunpack.c.h.b16 %v162
    %v254 = vunpack.c.l.b16 %v163
    %v255 = vunpack.c.h.b16 %v163
    %v256 = vunpack.c.l.b16 %v164
    %v257 = vunpack.c.h.b16 %v164
    %v258 = vunpack.c.l.b16 %v165
    %v259 = vunpack.c.h.b16 %v165
    %v260 = vunpack.c.l.b16 %v166
    %v261 = vunpack.c.h.b16 %v166
    %v262 = vunpack.c.l.b16 %v167
    %v263 = vunpack.c.h.b16 %v167
    %v264 = vunpack.c.l.b16 %v168
    %v265 = vunpack.c.h.b16 %v168
    %v266 = vunpack.c.l.b16 %v169
    %v267 = vunpack.c.h.b16 %v169
    %v268 = vunpack.c.l.b16 %v170
    %v269 = vunpack.c.h.b16 %v170
    %v270 = vunpack.c.l.b16 %v171
    %v271 = vunpack.c.h.b16 %v171
    %v272 = vunpack.c.l.b16 %v172
    %v273 = vunpack.c.h.b16 %v172
    %v274 = vunpack.c.l.b16 %v173
    %v275 = vunpack.c.h.b16 %v173
    %v276 = vunpack.c.l.b16 %v174
    %v277 = vunpack.c.h.b16 %v174
    %v278 = vunpack.c.l.b16 %v175
    %v279 = vunpack.c.h.b16 %v175
    %v280 = vunpack.c.l.b16 %v176
    %v281 = vunpack.c.h.b16 %v176
    %v282 = vunpack.c.l.b16 %v177
    %v283 = vunpack.c.h.b16 %v177
    %v284 = vunpack.c.l.b16 %v178
    %v285 = vunpack.c.h.b16 %v178
    %v286 = vunpack.c.l.b16 %v179
    %v287 = vunpack.c.h.b16 %v179
    %v288 = vpack.c.b16 %v226, %v224
    %v289 = vpack.c.b16 %v227, %v225
    %v290 = vpack.c.b16 %v230, %v228
    %v291 = vpack.c.b16 %v231, %v229
    %v292 = vpack.c.b16 %v234, %v232
    %v293 = vpack.c.b16 %v235, %v233
    %v294 = vpack.c.b16 %v238, %v236
    %v295 = vpack.c.b16 %v239, %v237
    %v296 = vpack.c.b16 %v242, %v240
    %v297 = vpack.c.b16 %v243, %v241
    %v298 = vpack.c.b16 %v246, %v244
    %v299 = vpack.c.b16 %v247, %v245
    %v300 = vpack.c.b16 %v250, %v248
    %v301 = vpack.c.b16 %v251, %v249
    %v302 = vpack.c.b16 %v254, %v252
    %v303 = vpack.c.b16 %v255, %v253
    %v304 = vpack.c.b16 %v258, %v256
    %v305 = vpack.c.b16 %v259, %v257
    %v306 = vpack.c.b16 %v262, %v260
    %v307 = vpack.c.b16 %v263, %v261
    %v308 = vpack.c.b16 %v266, %v264
    %v309 = vpack.c.b16 %v267, %v265
    %v310 = vpack.c.b16 %v270, %v268
    %v311 = vpack.c.b16 %v271, %v269
    %v312 = vpack.c.b16 %v274, %v272
    %v313 = vpack.c.b16 %v275, %v273
    %v314 = vpack.c.b16 %v278, %v276
    %v315 = vpack.c.b16 %v279, %v277
    %v316 = vpack.c.b16 %v282, %v280
    %v317 = vpack.c.b16 %v283, %v281
    %v318 = vpack.c.b16 %v286, %v284
    %v319 = vpack.c.b16 %v287, %v285
    %352 = vmatprep.subr.bf16.mxu0 %v289
    %353 = vmatpush1.bf16.msra.mxu0 %v288
    %354 = vmatprep.subr.bf16.mxu0 %v291
    %355 = vmatpush1.bf16.msra.mxu0 %v290
    %356 = vmatprep.subr.bf16.mxu0 %v293
    %357 = vmatpush1.bf16.msra.mxu0 %v292
    %358 = vmatprep.subr.bf16.mxu0 %v295
    %359 = vmatpush1.bf16.msra.mxu0 %v294
    %360 = vmatprep.subr.bf16.mxu0 %v297
    %361 = vmatpush1.bf16.msra.mxu0 %v296
    %362 = vmatprep.subr.bf16.mxu0 %v299
    %363 = vmatpush1.bf16.msra.mxu0 %v298
    %364 = vmatprep.subr.bf16.mxu0 %v301
    %365 = vmatpush1.bf16.msra.mxu0 %v300
    %366 = vmatprep.subr.bf16.mxu0 %v303
    %367 = vmatpush1.bf16.msra.mxu0 %v302
    %368 = vmatprep.subr.bf16.mxu0 %v305
    %369 = vmatpush1.bf16.msra.mxu0 %v304
    %370 = vmatprep.subr.bf16.mxu0 %v307
    %371 = vmatpush1.bf16.msra.mxu0 %v306
    %372 = vmatprep.subr.bf16.mxu0 %v309
    %373 = vmatpush1.bf16.msra.mxu0 %v308
    %374 = vmatprep.subr.bf16.mxu0 %v311
    %375 = vmatpush1.bf16.msra.mxu0 %v310
    %376 = vmatprep.subr.bf16.mxu0 %v313
    %377 = vmatpush1.bf16.msra.mxu0 %v312
    %378 = vmatprep.subr.bf16.mxu0 %v315
    %379 = vmatpush1.bf16.msra.mxu0 %v314
    %380 = vmatprep.subr.bf16.mxu0 %v317
    %381 = vmatpush1.bf16.msra.mxu0 %v316
    %382 = vmatprep.subr.bf16.mxu0 %v319
    %383 = vmatpush1.bf16.msra.mxu0 %v318
    %384 = vmatprep.mubr.bf16.mxu0 %v147
    %385 = vmatmul.mubr.bf16.gmra.mrb[0].mxu0 %v146
    %v386 = vpop.f32.mrb[0].mxu0
    %v387 = vadd.f32 %v185, %v386
    %v388 = vpop.f32.mrb[0].mxu0
    %v389 = vadd.f32 %v189, %v388
    %v390 = vpop.f32.mrb[0].mxu0
    %v391 = vadd.f32 %v185, %v390
    %v392 = vpop.f32.mrb[0].mxu0
    %v393 = vadd.f32 %v189, %v392
    %394 = vdwg.mxu0
    %v395 = vmax.f32 %v387, 0.0
    %v396 = vmax.f32 %v389, 0.0
    %v397 = vmax.f32 %v391, 0.0
    %v398 = vmax.f32 %v393, 0.0
    %v399 = vpack.c.bf16 %v397, %v395
    %v400 = vpack.c.bf16 %v398, %v396
    %v401 = vld [vmem:[#allocation5] sm:$0xf]
    %v402 = vld [vmem:[#allocation5 + $0x4] sm:$0xf]
    %v403 = vld [vmem:[#allocation5 + $0x8] sm:$0xf]
    %v404 = vld [vmem:[#allocation5 + $0xc] sm:$0xf]
    %v405 = vld [vmem:[#allocation5 + $0x10] sm:$0xf]
    %v406 = vld [vmem:[#allocation5 + $0x14] sm:$0xf]
    %v407 = vld [vmem:[#allocation5 + $0x18] sm:$0xf]
    %v408 = vld [vmem:[#allocation5 + $0x1c] sm:$0xf]
    %v409 = vld [vmem:[#allocation5 + $0x20] sm:$0xf]
    %v410 = vld [vmem:[#allocation5 + $0x24] sm:$0xf]
    %v411 = vld [vmem:[#allocation5 + $0x28] sm:$0xf]
    %v412 = vld [vmem:[#allocation5 + $0x2c] sm:$0xf]
    %v413 = vld [vmem:[#allocation5 + $0x30] sm:$0xf]
    %v414 = vld [vmem:[#allocation5 + $0x34] sm:$0xf]
    %v415 = vld [vmem:[#allocation5 + $0x38] sm:$0xf]
    %v416 = vld [vmem:[#allocation5 + $0x3c] sm:$0xf]
    %v417 = vld [vmem:[#allocation5 + $0x40] sm:$0xf]
    %v418 = vld [vmem:[#allocation5 + $0x44] sm:$0xf]
    %v419 = vld [vmem:[#allocation5 + $0x48] sm:$0xf]
    %v420 = vld [vmem:[#allocation5 + $0x4c] sm:$0xf]
    %v421 = vld [vmem:[#allocation5 + $0x50] sm:$0xf]
    %v422 = vld [vmem:[#allocation5 + $0x54] sm:$0xf]
    %v423 = vld [vmem:[#allocation5 + $0x58] sm:$0xf]
    %v424 = vld [vmem:[#allocation5 + $0x5c] sm:$0xf]
    %v425 = vld [vmem:[#allocation5 + $0x60] sm:$0xf]
    %v426 = vld [vmem:[#allocation5 + $0x64] sm:$0xf]
    %v427 = vld [vmem:[#allocation5 + $0x68] sm:$0xf]
    %v428 = vld [vmem:[#allocation5 + $0x6c] sm:$0xf]
    %v429 = vld [vmem:[#allocation5 + $0x70] sm:$0xf]
    %v430 = vld [vmem:[#allocation5 + $0x74] sm:$0xf]
    %v431 = vld [vmem:[#allocation5 + $0x78] sm:$0xf]
    %v432 = vld [vmem:[#allocation5 + $0x7c] sm:$0xf]
    %v433 = vld [vmem:[%s6] sm:$0x1]
    %v435 = vlaneseq
    %v436 = vshrl.u32 %v435, 7
    %v437 = vsub.s32 0, %v436
    %v438 = vrot.slane %v433, %v437
    %v472 = vunpack.c.l.b16 %v401
    %v473 = vunpack.c.l.b16 %v402
    %v474 = vunpack.c.l.b16 %v403
    %v475 = vunpack.c.l.b16 %v404
    %v476 = vunpack.c.l.b16 %v405
    %v477 = vunpack.c.l.b16 %v406
    %v478 = vunpack.c.l.b16 %v407
    %v479 = vunpack.c.l.b16 %v408
    %v480 = vunpack.c.l.b16 %v409
    %v481 = vunpack.c.l.b16 %v410
    %v482 = vunpack.c.l.b16 %v411
    %v483 = vunpack.c.l.b16 %v412
    %v484 = vunpack.c.l.b16 %v413
    %v485 = vunpack.c.l.b16 %v414
    %v486 = vunpack.c.l.b16 %v415
    %v487 = vunpack.c.l.b16 %v416
    %v488 = vunpack.c.l.b16 %v417
    %v489 = vunpack.c.l.b16 %v418
    %v490 = vunpack.c.l.b16 %v419
    %v491 = vunpack.c.l.b16 %v420
    %v492 = vunpack.c.l.b16 %v421
    %v493 = vunpack.c.l.b16 %v422
    %v494 = vunpack.c.l.b16 %v423
    %v495 = vunpack.c.l.b16 %v424
    %v496 = vunpack.c.l.b16 %v425
    %v497 = vunpack.c.l.b16 %v426
    %v498 = vunpack.c.l.b16 %v427
    %v499 = vunpack.c.l.b16 %v428
    %v500 = vunpack.c.l.b16 %v429
    %v501 = vunpack.c.l.b16 %v430
    %v502 = vunpack.c.l.b16 %v431
    %v503 = vunpack.c.l.b16 %v432
    %v504 = vpack.c.b16 %v473, %v472
    %v505 = vpack.c.b16 %v475, %v474
    %v506 = vpack.c.b16 %v477, %v476
    %v507 = vpack.c.b16 %v479, %v478
    %v508 = vpack.c.b16 %v481, %v480
    %v509 = vpack.c.b16 %v483, %v482
    %v510 = vpack.c.b16 %v485, %v484
    %v511 = vpack.c.b16 %v487, %v486
    %v512 = vpack.c.b16 %v489, %v488
    %v513 = vpack.c.b16 %v491, %v490
    %v514 = vpack.c.b16 %v493, %v492
    %v515 = vpack.c.b16 %v495, %v494
    %v516 = vpack.c.b16 %v497, %v496
    %v517 = vpack.c.b16 %v499, %v498
    %v518 = vpack.c.b16 %v501, %v500
    %v519 = vpack.c.b16 %v503, %v502
    %536 = vmatprep.subr.bf16.mxu0 0
    %537 = vmatpush1.bf16.msra.mxu0 %v504
    %538 = vmatprep.subr.bf16.mxu0 0
    %539 = vmatpush1.bf16.msra.mxu0 %v505
    %540 = vmatprep.subr.bf16.mxu0 0
    %541 = vmatpush1.bf16.msra.mxu0 %v506
    %542 = vmatprep.subr.bf16.mxu0 0
    %543 = vmatpush1.bf16.msra.mxu0 %v507
    %544 = vmatprep.subr.bf16.mxu0 0
    %545 = vmatpush1.bf16.msra.mxu0 %v508
    %546 = vmatprep.subr.bf16.mxu0 0
    %547 = vmatpush1.bf16.msra.mxu0 %v509
    %548 = vmatprep.subr.bf16.mxu0 0
    %549 = vmatpush1.bf16.msra.mxu0 %v510
    %550 = vmatprep.subr.bf16.mxu0 0
    %551 = vmatpush1.bf16.msra.mxu0 %v511
    %552 = vmatprep.subr.bf16.mxu0 0
    %553 = vmatpush1.bf16.msra.mxu0 %v512
    %554 = vmatprep.subr.bf16.mxu0 0
    %555 = vmatpush1.bf16.msra.mxu0 %v513
    %556 = vmatprep.subr.bf16.mxu0 0
    %557 = vmatpush1.bf16.msra.mxu0 %v514
    %558 = vmatprep.subr.bf16.mxu0 0
    %559 = vmatpush1.bf16.msra.mxu0 %v515
    %560 = vmatprep.subr.bf16.mxu0 0
    %561 = vmatpush1.bf16.msra.mxu0 %v516
    %562 = vmatprep.subr.bf16.mxu0 0
    %563 = vmatpush1.bf16.msra.mxu0 %v517
    %564 = vmatprep.subr.bf16.mxu0 0
    %565 = vmatpush1.bf16.msra.mxu0 %v518
    %566 = vmatprep.subr.bf16.mxu0 0
    %567 = vmatpush1.bf16.msra.mxu0 %v519
    %568 = vmatprep.mubr.bf16.mxu0 %v400
    %569 = vmatmul.mubr.bf16.gmra.mrb[0].mxu0 %v399
    %v570 = vpop.f32.mrb[0].mxu0
    %v571 = vadd.f32 %v438, %v570
    %v572 = vpop.f32.mrb[0].mxu0
    %v573 = vpop.f32.mrb[0].mxu0
    %v574 = vadd.f32 %v438, %v573
    %v575 = vpop.f32.mrb[0].mxu0
    %576 = vdwg.mxu0
    %577 = vst [vmem:[#allocation7] sm:$0xff] %v571
    %578 = vst [vmem:[#allocation7 + $0x8] sm:$0xff] %v574
    // Predicated region
    $region38: #{tpu_custom_call.1} parent=1 // pred_check
      _
    $region39: #{tpu_custom_call.1} parent=1 // pred_check_branch
      %580 = sbr.rel (0) target = $region41
    $region40: #{tpu_custom_call.1} parent=1 // pred_region
      %s582 = ssub.s32 256, 256
      %583 = vsyncadd [#allocation4], %s582
      %s584 = sshll.u32 [#allocation7], 4
      %s585 = int_to_ptr.vmem [resolvable:$true] %s584
      %590 = dma.vmem_to_hbm [thread:$0]  %s585, 256, %s7, [#allocation4], 128, 128, 8
    $region41: #{tpu_custom_call.1} parent=1 // pred_fallthru
      _
    // Predicated region
    $region42: #{tpu_custom_call.1} parent=1 // pred_check
      _
    $region43: #{tpu_custom_call.1} parent=1 // pred_check_branch
      %592 = sbr.rel (0) target = $region45
    $region44: #{tpu_custom_call.1} parent=1 // pred_region
      %593 = dma.done [#allocation4], 256
    $region45: #{tpu_custom_call.1} parent=1 // pred_fallthru
      _
    %594 = vsyncpa [#allocation3], 1
    %595 = vsyncpa [#allocation6], 1
    %596 = vsyncpa [#allocation4], 1

</llo_original>
